<compile_context>
chip_gen: v7x
topology: tpu7x:2x2x1
jax: 0.10.0
libtpu: 0.0.40
codegen_flags: <defaults>
</compile_context>

<pallas_src>
import jax
import jax.numpy as jnp
from jax.experimental import pallas as pl
from jax.experimental.pallas import tpu as pltpu


def _round_up(x, m):
    return ((x + m - 1) // m) * m


def critic_kernel(state_ref, action_ref, w1s_ref, w1a_ref, b1_ref,
                  w2_ref, b2_ref, w3_ref, b3_ref, o_ref):
    """One batch tile of the critic MLP.

    state_ref : (TB, num_inputs)  f32
    action_ref: (TB, num_actions) f32
    w1s/w1a   : (num_inputs, H) / (num_actions, H)  f32 or bf16 (MXU operands)
    b1, b2    : (1, H) f32
    w2        : (H, H)  f32 or bf16
    w3        : (1, H) f32 row  (final layer done on VPU/XLU, not MXU)
    b3        : (1, 1) f32 scalar in SMEM
    o_ref     : (TB, 1) f32
    """
    mm_dtype = w1s_ref.dtype  # bf16 on v6e/v7x fast path, f32 otherwise

    s = state_ref[...]
    a = action_ref[...]

    # Layer 1 -- concat fused into two MXU matmuls, accumulated in f32.
    h1 = (jnp.dot(s.astype(mm_dtype), w1s_ref[...],
                  preferred_element_type=jnp.float32)
          + jnp.dot(a.astype(mm_dtype), w1a_ref[...],
                    preferred_element_type=jnp.float32)
          + b1_ref[...])
    h1 = jnp.tanh(h1)  # f32 on VPU/EUP (v5e has no bf16 VPU)

    # Layer 2.
    h2 = jnp.dot(h1.astype(mm_dtype), w2_ref[...],
                 preferred_element_type=jnp.float32) + b2_ref[...]
    h2 = jnp.tanh(h2)

    # Layer 3 (H -> 1): a width-1 matmul would waste the MXU; do it as a
    # VPU multiply + cross-lane reduce instead.
    w3 = w3_ref[...].astype(jnp.float32)                       # (1, H)
    q = jnp.sum(h2 * w3, axis=-1, keepdims=True) + b3_ref[0, 0]

    o_ref[...] = q.astype(o_ref.dtype)


def critic_forward(state, action, params, *, block_b=256, use_bf16_matmul=False):
    """Pallas-backed Critic forward. state: [B, num_inputs], action: [B, num_actions]."""
    w1_s, w1_a, b1, w2, b2, w3, b3 = params
    state = state.astype(jnp.float32)
    action = action.astype(jnp.float32)
    B, num_inputs = state.shape
    num_actions = action.shape[1]

    # Optionally feed the MXU bf16 operands (f32 accumulation stays in-kernel).
    mm_dtype = jnp.bfloat16 if use_bf16_matmul else jnp.float32
    w1_s = w1_s.astype(mm_dtype)
    w1_a = w1_a.astype(mm_dtype)
    w2 = w2.astype(mm_dtype)
    # b1/b2/w3/b3 stay f32: bias adds, tanh and the final reduce run in f32.

    # Batch tile: multiple of 8 sublanes; cap at block_b so per-step activations
    # stay small even under v7x's 64 MiB VMEM.
    TB = min(block_b, _round_up(B, 8))
    Bp = _round_up(B, TB)
    if Bp != B:
        pad = Bp - B
        state = jnp.pad(state, ((0, pad), (0, 0)))
        action = jnp.pad(action, ((0, pad), (0, 0)))

    grid = (Bp // TB,)

    batch_spec = lambda d: pl.BlockSpec((TB, d), lambda i: (i, 0))
    resident = lambda arr: pl.BlockSpec(arr.shape, lambda i: (0, 0))

    q = pl.pallas_call(
        critic_kernel,
        out_shape=jax.ShapeDtypeStruct((Bp, 1), jnp.float32),
        grid=grid,
        in_specs=[
            batch_spec(num_inputs),                              # state tile
            batch_spec(num_actions),                             # action tile
            resident(w1_s), resident(w1_a), resident(b1),        # VMEM-resident
            resident(w2), resident(b2), resident(w3),
            pl.BlockSpec(memory_space=pltpu.MemorySpace.SMEM),   # b3 scalar
        ],
        out_specs=pl.BlockSpec((TB, 1), lambda i: (i, 0)),
        compiler_params=pltpu.CompilerParams(
            dimension_semantics=("parallel",)),  # batch tiles across v7x's 2 TCs
    )(state, action, w1_s, w1_a, b1, w2, b2, w3, b3)

    return q[:B]


def xavier_uniform(key, fan_in, fan_out, gain=0.5):
    # Matches torch.nn.init.xavier_uniform_(..., gain=0.5):
    # limit = gain * sqrt(6 / (fan_in + fan_out)), U(-limit, limit).
    limit = gain * (6.0 / (fan_in + fan_out)) ** 0.5
    # PyTorch weight is [out, in]; we store transposed [in, out] for x @ W.
    return jax.random.uniform(key, (fan_in, fan_out), jnp.float32, -limit, limit)


def init_critic_params(key, num_inputs, num_actions, hidden_size):
    d = num_inputs + num_actions
    k1, k2, k3 = jax.random.split(key, 3)
    # Full first-layer weight is [D, H]; split by rows so the concat is fused:
    # x @ w1 == state @ w1[:num_inputs] + action @ w1[num_inputs:].
    w1 = xavier_uniform(k1, d, hidden_size)
    w1_s, w1_a = w1[:num_inputs], w1[num_inputs:]
    b1 = jnp.zeros((1, hidden_size), jnp.float32)
    w2 = xavier_uniform(k2, hidden_size, hidden_size)
    b2 = jnp.zeros((1, hidden_size), jnp.float32)
    # Final layer stored as a (1, H) row (used as VPU mul + lane reduce in-kernel).
    w3 = xavier_uniform(k3, hidden_size, 1).T
    b3 = jnp.zeros((1, 1), jnp.float32)
    return (w1_s, w1_a, b1, w2, b2, w3, b3)


if __name__ == "__main__":
    B, num_inputs, num_actions, hidden = 8, 16, 8, 32

    key = jax.random.PRNGKey(0)
    kp, ks, ka = jax.random.split(key, 3)

    params = init_critic_params(kp, num_inputs, num_actions, hidden)
    state = jax.random.normal(ks, (B, num_inputs), jnp.float32)
    action = jax.random.normal(ka, (B, num_actions), jnp.float32)

    q = critic_forward(state, action, params)
    jax.block_until_ready(q)

    # Pure-JAX reference (same math as the PyTorch module's forward).
    w1_s, w1_a, b1, w2, b2, w3, b3 = params
    x = jnp.concatenate([state, action], axis=-1)
    w1 = jnp.concatenate([w1_s, w1_a], axis=0)
    ref = jnp.tanh(x @ w1 + b1)
    ref = jnp.tanh(ref @ w2 + b2)
    ref = ref @ w3.T + b3

    assert q.shape == (B, 1)
    assert jnp.allclose(q, ref, atol=1e-4, rtol=1e-4)

    # bf16-MXU fast path (v6e/v7x): f32 accumulation, f32 elementwise.
    q_bf16 = critic_forward(state, action, params, use_bf16_matmul=True)
    jax.block_until_ready(q_bf16)
    assert q_bf16.shape == (B, 1)
    assert jnp.allclose(q_bf16, ref, atol=2e-2, rtol=2e-2)

    print("KERNEL_OK")
</pallas_src>

<mosaic_0001>
module attributes {stable_mosaic.version = 11 : i64} {
  func.func @critic_kernel(%arg0: i32, %arg1: memref<8x16xf32, #tpu.memory_space<vmem>>, %arg2: memref<8x8xf32, #tpu.memory_space<vmem>>, %arg3: memref<16x32xf32, #tpu.memory_space<vmem>>, %arg4: memref<8x32xf32, #tpu.memory_space<vmem>>, %arg5: memref<1x32xf32, #tpu.memory_space<vmem>>, %arg6: memref<32x32xf32, #tpu.memory_space<vmem>>, %arg7: memref<1x32xf32, #tpu.memory_space<vmem>>, %arg8: memref<1x32xf32, #tpu.memory_space<vmem>>, %arg9: memref<1x1xf32, #tpu.memory_space<smem>>, %arg10: memref<8x1xf32, #tpu.memory_space<vmem>>) attributes {dimension_semantics = [#tpu.dimension_semantics<parallel>], iteration_bounds = array<i64: 1>, scalar_prefetch = 0 : i64, scratch_operands = 0 : i64, tpu.core_type = #tpu.core_type<tc>, window_params = [{transform_indices = @transform_0, window_bounds = array<i64: 8, 16>}, {transform_indices = @transform_1, window_bounds = array<i64: 8, 8>}, {pipeline_mode = #tpu.pipeline_mode<synchronous>, transform_indices = @transform_2, window_bounds = array<i64: 16, 32>}, {pipeline_mode = #tpu.pipeline_mode<synchronous>, transform_indices = @transform_3, window_bounds = array<i64: 8, 32>}, {pipeline_mode = #tpu.pipeline_mode<synchronous>, transform_indices = @transform_4, window_bounds = array<i64: 1, 32>}, {pipeline_mode = #tpu.pipeline_mode<synchronous>, transform_indices = @transform_5, window_bounds = array<i64: 32, 32>}, {pipeline_mode = #tpu.pipeline_mode<synchronous>, transform_indices = @transform_6, window_bounds = array<i64: 1, 32>}, {pipeline_mode = #tpu.pipeline_mode<synchronous>, transform_indices = @transform_7, window_bounds = array<i64: 1, 32>}, {transform_indices = @transform_8, window_bounds = array<i64: 1, 1>}, {transform_indices = @transform_9, window_bounds = array<i64: 8, 1>}]} {
    %c0 = arith.constant 0 : index
    %c0_0 = arith.constant 0 : index
    %0 = vector.load %arg1[%c0, %c0_0] : memref<8x16xf32, #tpu.memory_space<vmem>>, vector<8x16xf32>
    %c0_1 = arith.constant 0 : index
    %c0_2 = arith.constant 0 : index
    %1 = vector.load %arg2[%c0_1, %c0_2] : memref<8x8xf32, #tpu.memory_space<vmem>>, vector<8x8xf32>
    %c0_3 = arith.constant 0 : index
    %c0_4 = arith.constant 0 : index
    %2 = vector.load %arg3[%c0_3, %c0_4] : memref<16x32xf32, #tpu.memory_space<vmem>>, vector<16x32xf32>
    %cst = arith.constant dense<0.000000e+00> : vector<8x32xf32>
    %3 = tpu.matmul %0, %2, %cst {dimension_numbers = #tpu.dot_dimension_numbers<[1], [0], [0], [1], [0, 0, 1, 1], [], []>} : vector<8x16xf32>, vector<16x32xf32>, vector<8x32xf32> -> vector<8x32xf32>
    %c0_5 = arith.constant 0 : index
    %c0_6 = arith.constant 0 : index
    %4 = vector.load %arg4[%c0_5, %c0_6] : memref<8x32xf32, #tpu.memory_space<vmem>>, vector<8x32xf32>
    %cst_7 = arith.constant dense<0.000000e+00> : vector<8x32xf32>
    %5 = tpu.matmul %1, %4, %cst_7 {dimension_numbers = #tpu.dot_dimension_numbers<[1], [0], [0], [1], [0, 0, 1, 1], [], []>} : vector<8x8xf32>, vector<8x32xf32>, vector<8x32xf32> -> vector<8x32xf32>
    %6 = arith.addf %3, %5 : vector<8x32xf32>
    %c0_8 = arith.constant 0 : index
    %c0_9 = arith.constant 0 : index
    %7 = vector.load %arg5[%c0_8, %c0_9] : memref<1x32xf32, #tpu.memory_space<vmem>>, vector<1x32xf32>
    %8 = vector.broadcast %7 : vector<1x32xf32> to vector<8x32xf32>
    %9 = arith.addf %6, %8 : vector<8x32xf32>
    %10 = math.tanh %9 : vector<8x32xf32>
    %c0_10 = arith.constant 0 : index
    %c0_11 = arith.constant 0 : index
    %11 = vector.load %arg6[%c0_10, %c0_11] : memref<32x32xf32, #tpu.memory_space<vmem>>, vector<32x32xf32>
    %cst_12 = arith.constant dense<0.000000e+00> : vector<8x32xf32>
    %12 = tpu.matmul %10, %11, %cst_12 {dimension_numbers = #tpu.dot_dimension_numbers<[1], [0], [0], [1], [0, 0, 1, 1], [], []>} : vector<8x32xf32>, vector<32x32xf32>, vector<8x32xf32> -> vector<8x32xf32>
    %c0_13 = arith.constant 0 : index
    %c0_14 = arith.constant 0 : index
    %13 = vector.load %arg7[%c0_13, %c0_14] : memref<1x32xf32, #tpu.memory_space<vmem>>, vector<1x32xf32>
    %14 = vector.broadcast %13 : vector<1x32xf32> to vector<8x32xf32>
    %15 = arith.addf %12, %14 : vector<8x32xf32>
    %16 = math.tanh %15 : vector<8x32xf32>
    %c0_15 = arith.constant 0 : index
    %c0_16 = arith.constant 0 : index
    %17 = vector.load %arg8[%c0_15, %c0_16] : memref<1x32xf32, #tpu.memory_space<vmem>>, vector<1x32xf32>
    %18 = vector.broadcast %17 : vector<1x32xf32> to vector<8x32xf32>
    %19 = arith.mulf %16, %18 : vector<8x32xf32>
    %cst_17 = arith.constant dense<0.000000e+00> : vector<8xf32>
    %20 = vector.multi_reduction <add>, %19, %cst_17 [1] : vector<8x32xf32> to vector<8xf32>
    %21 = vector.shape_cast %20 : vector<8xf32> to vector<8x1xf32>
    %c0_18 = arith.constant 0 : index
    %c0_19 = arith.constant 0 : index
    %22 = memref.load %arg9[%c0_18, %c0_19] : memref<1x1xf32, #tpu.memory_space<smem>>
    %23 = vector.broadcast %22 : f32 to vector<8x1xf32>
    %24 = arith.addf %21, %23 : vector<8x1xf32>
    %c0_20 = arith.constant 0 : index
    %c0_21 = arith.constant 0 : index
    %25 = vector.load %arg10[%c0_20, %c0_21] : memref<8x1xf32, #tpu.memory_space<vmem>>, vector<8x1xf32>
    tpu.vector_store %arg10[%c0_20, %c0_21], %24 {strides = array<i32>} : memref<8x1xf32, #tpu.memory_space<vmem>>, vector<8x1xf32>,
    return
  }
  func.func @transform_0(%arg0: i32) -> (i32, i32) {
    %c0_i32 = arith.constant 0 : i32
    %c0_i32_0 = arith.constant 0 : i32
    return %arg0, %c0_i32 : i32, i32
  }
  func.func @transform_1(%arg0: i32) -> (i32, i32) {
    %c0_i32 = arith.constant 0 : i32
    %c0_i32_0 = arith.constant 0 : i32
    return %arg0, %c0_i32 : i32, i32
  }
  func.func @transform_2(%arg0: i32) -> (i32, i32) {
    %c0_i32 = arith.constant 0 : i32
    %c0_i32_0 = arith.constant 0 : i32
    %c0_i32_1 = arith.constant 0 : i32
    return %c0_i32, %c0_i32_0 : i32, i32
  }
  func.func @transform_3(%arg0: i32) -> (i32, i32) {
    %c0_i32 = arith.constant 0 : i32
    %c0_i32_0 = arith.constant 0 : i32
    %c0_i32_1 = arith.constant 0 : i32
    return %c0_i32, %c0_i32_0 : i32, i32
  }
  func.func @transform_4(%arg0: i32) -> (i32, i32) {
    %c0_i32 = arith.constant 0 : i32
    %c0_i32_0 = arith.constant 0 : i32
    %c0_i32_1 = arith.constant 0 : i32
    return %c0_i32, %c0_i32_0 : i32, i32
  }
  func.func @transform_5(%arg0: i32) -> (i32, i32) {
    %c0_i32 = arith.constant 0 : i32
    %c0_i32_0 = arith.constant 0 : i32
    %c0_i32_1 = arith.constant 0 : i32
    return %c0_i32, %c0_i32_0 : i32, i32
  }
  func.func @transform_6(%arg0: i32) -> (i32, i32) {
    %c0_i32 = arith.constant 0 : i32
    %c0_i32_0 = arith.constant 0 : i32
    %c0_i32_1 = arith.constant 0 : i32
    return %c0_i32, %c0_i32_0 : i32, i32
  }
  func.func @transform_7(%arg0: i32) -> (i32, i32) {
    %c0_i32 = arith.constant 0 : i32
    %c0_i32_0 = arith.constant 0 : i32
    %c0_i32_1 = arith.constant 0 : i32
    return %c0_i32, %c0_i32_0 : i32, i32
  }
  func.func @transform_8(%arg0: i32) -> (i32, i32) {
    %c0_i32 = arith.constant 0 : i32
    %c0_i32_0 = arith.constant 0 : i32
    %c0_i32_1 = arith.constant 0 : i32
    return %c0_i32, %c0_i32_0 : i32, i32
  }
  func.func @transform_9(%arg0: i32) -> (i32, i32) {
    %c0_i32 = arith.constant 0 : i32
    %c0_i32_0 = arith.constant 0 : i32
    return %arg0, %c0_i32 : i32, i32
  }
}

</mosaic_0001>

<llo_original>
// kernel: tpu_custom_call.1
$region0: #{tpu_custom_call.1}
  #allocation0 [shape = 'u32[]', space=smem, size = 0x4, offset = 0x4, fixed_abs, tag = 'smem constant byte address 0x4 - core index']
  #allocation1 [shape = 'u32[144,128]{1,0:T(1,128)}', space=vmem, size = 0x12000, scoped, tag = 'internal scratch']
  #allocation2 [shape = 'f32[1,1]{1,0:T(1,128)S(6)}', space=smem, size = 0x200, scoped, tag = 'scoped memory for tpu_custom_call.1']
  %s0 = inlined_call_operand.hbm [shape: f32[8,16], index: 0, kind: input, shape index: {}]
  %s1 = inlined_call_operand.hbm [shape: f32[8,8], index: 1, kind: input, shape index: {}]
  %s2 = inlined_call_operand.hbm [shape: f32[16,32], index: 2, kind: input, shape index: {}]
  %s3 = inlined_call_operand.vmem [shape: f32[8,32], index: 3, kind: input, shape index: {}]
  %s4 = inlined_call_operand.vmem [shape: f32[1,32], index: 4, kind: input, shape index: {}]
  %s5 = inlined_call_operand.hbm [shape: f32[32,32], index: 5, kind: input, shape index: {}]
  %s6 = inlined_call_operand.vmem [shape: f32[1,32], index: 6, kind: input, shape index: {}]
  %s7 = inlined_call_operand.vmem [shape: f32[1,32], index: 7, kind: input, shape index: {}]
  %s8 = inlined_call_operand.<no memory space> [shape: f32[1,1], index: 8, kind: input, shape index: {}]
  %s9 = inlined_call_operand.vmem [shape: f32[8,1], index: 9, kind: output, shape index: {}]
  %s10 = sld [smem:[#allocation0]]
  $region62: #{tpu_custom_call.1} parent=0
    _
  %s12 = ssub.s32 1, %s10
  %s13 = scalar_select 0, %s12, %s10
  %14 = sst [smem:[#allocation2]] %s8
  $region1: #{tpu_custom_call.1} parent=0
    #allocation3 [shape = 'u8[4096]{0}', space=vmem, size = 0x1000, scoped, tag = 'input window, operand 0, single buffered']
    #allocation4 [shape = 's32[1]{0}', space=sflag, size = 0x4, scoped, tag = 'scoped memory for tpu_custom_call.1']
    #allocation5 [shape = 'u8[4096]{0}', space=vmem, size = 0x1000, scoped, tag = 'input window, operand 1, single buffered']
    #allocation6 [shape = 's32[1]{0}', space=sflag, size = 0x4, scoped, tag = 'scoped memory for tpu_custom_call.1']
    #allocation7 [shape = 'u8[8192]{0}', space=vmem, size = 0x2000, scoped, tag = 'input window, operand 2, single buffered']
    #allocation8 [shape = 'u8[16384]{0}', space=vmem, size = 0x4000, scoped, tag = 'input window, operand 5, single buffered']
    #allocation9 [shape = 's32[1]{0}', space=sflag, size = 0x4, scoped, tag = 'scoped memory for tpu_custom_call.1']
    %15 = vsyncpa [#allocation4], 0
    %16 = vsyncpa [#allocation6], 0
    %17 = vsyncpa [#allocation9], 0
    // Predicated region
    $region2: #{tpu_custom_call.1} parent=1 // pred_check
      _
    $region3: #{tpu_custom_call.1} parent=1 // pred_check_branch
      %19 = sbr.rel (0) target = $region5
    $region4: #{tpu_custom_call.1} parent=1 // pred_region
      %s21 = ssub.s32 128, 128
      %22 = vsyncadd [#allocation4], %s21
      %s24 = sshll.u32 [#allocation3], 4
      %s25 = int_to_ptr.vmem [resolvable:$true] %s24
      %27 = dma.hbm_to_vmem [thread:$0]  %s0, 128, %s25, [#allocation4]
    $region5: #{tpu_custom_call.1} parent=1 // pred_fallthru
      _
    // Predicated region
    $region6: #{tpu_custom_call.1} parent=1 // pred_check
      _
    $region7: #{tpu_custom_call.1} parent=1 // pred_check_branch
      %29 = sbr.rel (0) target = $region9
    $region8: #{tpu_custom_call.1} parent=1 // pred_region
      %s31 = ssub.s32 128, 128
      %32 = vsyncadd [#allocation6], %s31
      %s34 = sshll.u32 [#allocation5], 4
      %s35 = int_to_ptr.vmem [resolvable:$true] %s34
      %37 = dma.hbm_to_vmem [thread:$0]  %s1, 128, %s35, [#allocation6]
    $region9: #{tpu_custom_call.1} parent=1 // pred_fallthru
      _
    // Predicated region
    $region10: #{tpu_custom_call.1} parent=1 // pred_check
      _
    $region11: #{tpu_custom_call.1} parent=1 // pred_check_branch
      %39 = sbr.rel (0) target = $region13
    $region12: #{tpu_custom_call.1} parent=1 // pred_region
      %s41 = ssub.s32 256, 256
      %42 = vsyncadd [#allocation6], %s41
      %s43 = sshll.u32 [#allocation7], 4
      %s44 = int_to_ptr.vmem [resolvable:$true] %s43
      %49 = dma.hbm_to_vmem [thread:$0]  %s2, 256, %s44, [#allocation6], 128, 128, 8
    $region13: #{tpu_custom_call.1} parent=1 // pred_fallthru
      _
    // Predicated region
    $region14: #{tpu_custom_call.1} parent=1 // pred_check
      _
    $region15: #{tpu_custom_call.1} parent=1 // pred_check_branch
      %51 = sbr.rel (0) target = $region17
    $region16: #{tpu_custom_call.1} parent=1 // pred_region
      _
    $region17: #{tpu_custom_call.1} parent=1 // pred_fallthru
      _
    // Predicated region
    $region18: #{tpu_custom_call.1} parent=1 // pred_check
      _
    $region19: #{tpu_custom_call.1} parent=1 // pred_check_branch
      %53 = sbr.rel (0) target = $region21
    $region20: #{tpu_custom_call.1} parent=1 // pred_region
      _
    $region21: #{tpu_custom_call.1} parent=1 // pred_fallthru
      _
    // Predicated region
    $region22: #{tpu_custom_call.1} parent=1 // pred_check
      _
    $region23: #{tpu_custom_call.1} parent=1 // pred_check_branch
      %55 = sbr.rel (0) target = $region25
    $region24: #{tpu_custom_call.1} parent=1 // pred_region
      %s57 = ssub.s32 512, 512
      %58 = vsyncadd [#allocation9], %s57
      %s59 = sshll.u32 [#allocation8], 4
      %s60 = int_to_ptr.vmem [resolvable:$true] %s59
      %65 = dma.hbm_to_vmem [thread:$0]  %s5, 512, %s60, [#allocation9], 128, 128, 8
    $region25: #{tpu_custom_call.1} parent=1 // pred_fallthru
      _
    // Predicated region
    $region26: #{tpu_custom_call.1} parent=1 // pred_check
      _
    $region27: #{tpu_custom_call.1} parent=1 // pred_check_branch
      %67 = sbr.rel (0) target = $region29
    $region28: #{tpu_custom_call.1} parent=1 // pred_region
      _
    $region29: #{tpu_custom_call.1} parent=1 // pred_fallthru
      _
    // Predicated region
    $region30: #{tpu_custom_call.1} parent=1 // pred_check
      _
    $region31: #{tpu_custom_call.1} parent=1 // pred_check_branch
      %69 = sbr.rel (0) target = $region33
    $region32: #{tpu_custom_call.1} parent=1 // pred_region
      _
    $region33: #{tpu_custom_call.1} parent=1 // pred_fallthru
      _
    // Predicated region
    $region34: #{tpu_custom_call.1} parent=1 // pred_check
      _
    $region35: #{tpu_custom_call.1} parent=1 // pred_check_branch
      %71 = sbr.rel (0) target = $region37
    $region36: #{tpu_custom_call.1} parent=1 // pred_region
      _
    $region37: #{tpu_custom_call.1} parent=1 // pred_fallthru
      _
    // Predicated region
    $region38: #{tpu_custom_call.1} parent=1 // pred_check
      _
    $region39: #{tpu_custom_call.1} parent=1 // pred_check_branch
      %73 = sbr.rel (0) target = $region41
    $region40: #{tpu_custom_call.1} parent=1 // pred_region
      %74 = dma.done [#allocation4], 128
    $region41: #{tpu_custom_call.1} parent=1 // pred_fallthru
      _
    // Predicated region
    $region42: #{tpu_custom_call.1} parent=1 // pred_check
      _
    $region43: #{tpu_custom_call.1} parent=1 // pred_check_branch
      %76 = sbr.rel (0) target = $region45
    $region44: #{tpu_custom_call.1} parent=1 // pred_region
      %77 = dma.done [#allocation6], 128
    $region45: #{tpu_custom_call.1} parent=1 // pred_fallthru
      _
    // Predicated region
    $region46: #{tpu_custom_call.1} parent=1 // pred_check
      _
    $region47: #{tpu_custom_call.1} parent=1 // pred_check_branch
      %79 = sbr.rel (0) target = $region49
    $region48: #{tpu_custom_call.1} parent=1 // pred_region
      %80 = dma.done [#allocation6], 256
    $region49: #{tpu_custom_call.1} parent=1 // pred_fallthru
      _
    // Predicated region
    $region50: #{tpu_custom_call.1} parent=1 // pred_check
      _
    $region51: #{tpu_custom_call.1} parent=1 // pred_check_branch
      %82 = sbr.rel (0) target = $region53
    $region52: #{tpu_custom_call.1} parent=1 // pred_region
      %83 = dma.done [#allocation9], 512
    $region53: #{tpu_custom_call.1} parent=1 // pred_fallthru
      _
    %v84 = vld [vmem:[#allocation3] sm:$0xff]
    %v85 = vld [vmem:[#allocation5] sm:$0xff]
    %v86 = vld [vmem:[#allocation7] sm:$0xff]
    %v87 = vld [vmem:[#allocation7 + $0x8] sm:$0xff]
    %v88 = vld [vmem:[%s3] sm:$0xff]
    %vm89 = vcmask 64512
    %v91 = vsel %vm89, %v85, 0
    %93 = vmatprep.subr.mxu0 0.0
    %94 = vmatpush1.msra.mxu0 %v88
    %95 = vmatprep.subr.mxu0 0.0
    %96 = vmatpush1.msra.mxu0 0.0
    %97 = vmatprep.subr.mxu0 0.0
    %98 = vmatpush1.msra.mxu0 0.0
    %99 = vmatprep.subr.mxu0 0.0
    %100 = vmatpush1.msra.mxu0 0.0
    %101 = vmatprep.subr.mxu0 0.0
    %102 = vmatpush1.msra.mxu0 0.0
    %103 = vmatprep.subr.mxu0 0.0
    %104 = vmatpush1.msra.mxu0 0.0
    %105 = vmatprep.subr.mxu0 0.0
    %106 = vmatpush1.msra.mxu0 0.0
    %107 = vmatprep.subr.mxu0 0.0
    %108 = vmatpush1.msra.mxu0 0.0
    %109 = vmatprep.subr.mxu0 0.0
    %110 = vmatpush1.msra.mxu0 0.0
    %111 = vmatprep.subr.mxu0 0.0
    %112 = vmatpush1.msra.mxu0 0.0
    %113 = vmatprep.subr.mxu0 0.0
    %114 = vmatpush1.msra.mxu0 0.0
    %115 = vmatprep.subr.mxu0 0.0
    %116 = vmatpush1.msra.mxu0 0.0
    %117 = vmatprep.subr.mxu0 0.0
    %118 = vmatpush1.msra.mxu0 0.0
    %119 = vmatprep.subr.mxu0 0.0
    %120 = vmatpush1.msra.mxu0 0.0
    %121 = vmatprep.subr.mxu0 0.0
    %122 = vmatpush1.msra.mxu0 0.0
    %123 = vmatprep.subr.mxu0 0.0
    %124 = vmatpush1.msra.mxu0 0.0
    %125 = vmatprep.subr.mxu0 0.0
    %126 = vmatpush1.msra.mxu0 0.0
    %127 = vmatprep.subr.mxu0 0.0
    %128 = vmatpush1.msra.mxu0 0.0
    %129 = vmatprep.subr.mxu0 0.0
    %130 = vmatpush1.msra.mxu0 0.0
    %131 = vmatprep.subr.mxu0 0.0
    %132 = vmatpush1.msra.mxu0 0.0
    %133 = vmatprep.subr.mxu0 0.0
    %134 = vmatpush1.msra.mxu0 0.0
    %135 = vmatprep.subr.mxu0 0.0
    %136 = vmatpush1.msra.mxu0 0.0
    %137 = vmatprep.subr.mxu0 0.0
    %138 = vmatpush1.msra.mxu0 0.0
    %139 = vmatprep.subr.mxu0 0.0
    %140 = vmatpush1.msra.mxu0 0.0
    %141 = vmatprep.subr.mxu0 0.0
    %142 = vmatpush1.msra.mxu0 0.0
    %143 = vmatprep.subr.mxu0 0.0
    %144 = vmatpush1.msra.mxu0 0.0
    %145 = vmatprep.subr.mxu0 0.0
    %146 = vmatpush1.msra.mxu0 0.0
    %147 = vmatprep.subr.mxu0 0.0
    %148 = vmatpush1.msra.mxu0 0.0
    %149 = vmatprep.subr.mxu0 0.0
    %150 = vmatpush1.msra.mxu0 0.0
    %151 = vmatprep.subr.mxu0 0.0
    %152 = vmatpush1.msra.mxu0 0.0
    %153 = vmatprep.subr.mxu0 0.0
    %154 = vmatpush1.msra.mxu0 0.0
    %155 = vmatprep.subr.mxu0 0.0
    %156 = vmatpush1.msra.mxu0 0.0
    %157 = vmatprep.mubr.f32.mxu0 0.0
    %158 = vmatmul.mubr.f32.gmra.mrb[0].mxu0 %v91
    %v159 = vpop.f32.mrb[0].mxu0
    %v160 = vadd.f32 0.0, %v159
    %v161 = vpop.f32.mrb[0].mxu0
    %162 = vdwg.mxu0
    %vm163 = vcmask 130048
    %v165 = vsel %vm163, %v84, 0
    %167 = vmatprep.subr.mxu0 0.0
    %168 = vmatpush1.msra.mxu0 %v86
    %169 = vmatprep.subr.mxu0 0.0
    %170 = vmatpush1.msra.mxu0 %v87
    %171 = vmatprep.subr.mxu0 0.0
    %172 = vmatpush1.msra.mxu0 0.0
    %173 = vmatprep.subr.mxu0 0.0
    %174 = vmatpush1.msra.mxu0 0.0
    %175 = vmatprep.subr.mxu0 0.0
    %176 = vmatpush1.msra.mxu0 0.0
    %177 = vmatprep.subr.mxu0 0.0
    %178 = vmatpush1.msra.mxu0 0.0
    %179 = vmatprep.subr.mxu0 0.0
    %180 = vmatpush1.msra.mxu0 0.0
    %181 = vmatprep.subr.mxu0 0.0
    %182 = vmatpush1.msra.mxu0 0.0
    %183 = vmatprep.subr.mxu0 0.0
    %184 = vmatpush1.msra.mxu0 0.0
    %185 = vmatprep.subr.mxu0 0.0
    %186 = vmatpush1.msra.mxu0 0.0
    %187 = vmatprep.subr.mxu0 0.0
    %188 = vmatpush1.msra.mxu0 0.0
    %189 = vmatprep.subr.mxu0 0.0
    %190 = vmatpush1.msra.mxu0 0.0
    %191 = vmatprep.subr.mxu0 0.0
    %192 = vmatpush1.msra.mxu0 0.0
    %193 = vmatprep.subr.mxu0 0.0
    %194 = vmatpush1.msra.mxu0 0.0
    %195 = vmatprep.subr.mxu0 0.0
    %196 = vmatpush1.msra.mxu0 0.0
    %197 = vmatprep.subr.mxu0 0.0
    %198 = vmatpush1.msra.mxu0 0.0
    %199 = vmatprep.subr.mxu0 0.0
    %200 = vmatpush1.msra.mxu0 0.0
    %201 = vmatprep.subr.mxu0 0.0
    %202 = vmatpush1.msra.mxu0 0.0
    %203 = vmatprep.subr.mxu0 0.0
    %204 = vmatpush1.msra.mxu0 0.0
    %205 = vmatprep.subr.mxu0 0.0
    %206 = vmatpush1.msra.mxu0 0.0
    %207 = vmatprep.subr.mxu0 0.0
    %208 = vmatpush1.msra.mxu0 0.0
    %209 = vmatprep.subr.mxu0 0.0
    %210 = vmatpush1.msra.mxu0 0.0
    %211 = vmatprep.subr.mxu0 0.0
    %212 = vmatpush1.msra.mxu0 0.0
    %213 = vmatprep.subr.mxu0 0.0
    %214 = vmatpush1.msra.mxu0 0.0
    %215 = vmatprep.subr.mxu0 0.0
    %216 = vmatpush1.msra.mxu0 0.0
    %217 = vmatprep.subr.mxu0 0.0
    %218 = vmatpush1.msra.mxu0 0.0
    %219 = vmatprep.subr.mxu0 0.0
    %220 = vmatpush1.msra.mxu0 0.0
    %221 = vmatprep.subr.mxu0 0.0
    %222 = vmatpush1.msra.mxu0 0.0
    %223 = vmatprep.subr.mxu0 0.0
    %224 = vmatpush1.msra.mxu0 0.0
    %225 = vmatprep.subr.mxu0 0.0
    %226 = vmatpush1.msra.mxu0 0.0
    %227 = vmatprep.subr.mxu0 0.0
    %228 = vmatpush1.msra.mxu0 0.0
    %229 = vmatprep.subr.mxu0 0.0
    %230 = vmatpush1.msra.mxu0 0.0
    %231 = vmatprep.mubr.f32.mxu0 0.0
    %232 = vmatmul.mubr.f32.gmra.mrb[0].mxu0 %v165
    %v233 = vpop.f32.mrb[0].mxu0
    %v234 = vadd.f32 %v160, %v233
    %v235 = vpop.f32.mrb[0].mxu0
    %236 = vdwg.mxu0
    %v237 = vld [vmem:[%s4] sm:$0x1]
    %v239 = vlaneseq
    %v240 = vshrl.u32 %v239, 7
    %v241 = vsub.s32 0, %v240
    %v242 = vrot.slane %v237, %v241
    %v244 = vadd.f32 %v234, %v242
    %v245 = vtanh.pop %v244
    %v246 = vld [vmem:[#allocation8] sm:$0xff]
    %v247 = vld [vmem:[#allocation8 + $0x8] sm:$0xff]
    %v248 = vld [vmem:[#allocation8 + $0x10] sm:$0xff]
    %v249 = vld [vmem:[#allocation8 + $0x18] sm:$0xff]
    %v250 = vld [vmem:[%s6] sm:$0x1]
    %v252 = vlaneseq
    %v253 = vshrl.u32 %v252, 7
    %v254 = vsub.s32 0, %v253
    %v255 = vrot.slane %v250, %v254
    %vm257 = vcmask 261120
    %v259 = vsel %vm257, %v245, 0
    %261 = vmatprep.subr.mxu0 0.0
    %262 = vmatpush1.msra.mxu0 %v246
    %263 = vmatprep.subr.mxu0 0.0
    %264 = vmatpush1.msra.mxu0 %v247
    %265 = vmatprep.subr.mxu0 0.0
    %266 = vmatpush1.msra.mxu0 %v248
    %267 = vmatprep.subr.mxu0 0.0
    %268 = vmatpush1.msra.mxu0 %v249
    %269 = vmatprep.subr.mxu0 0.0
    %270 = vmatpush1.msra.mxu0 0.0
    %271 = vmatprep.subr.mxu0 0.0
    %272 = vmatpush1.msra.mxu0 0.0
    %273 = vmatprep.subr.mxu0 0.0
    %274 = vmatpush1.msra.mxu0 0.0
    %275 = vmatprep.subr.mxu0 0.0
    %276 = vmatpush1.msra.mxu0 0.0
    %277 = vmatprep.subr.mxu0 0.0
    %278 = vmatpush1.msra.mxu0 0.0
    %279 = vmatprep.subr.mxu0 0.0
    %280 = vmatpush1.msra.mxu0 0.0
    %281 = vmatprep.subr.mxu0 0.0
    %282 = vmatpush1.msra.mxu0 0.0
    %283 = vmatprep.subr.mxu0 0.0
    %284 = vmatpush1.msra.mxu0 0.0
    %285 = vmatprep.subr.mxu0 0.0
    %286 = vmatpush1.msra.mxu0 0.0
    %287 = vmatprep.subr.mxu0 0.0
    %288 = vmatpush1.msra.mxu0 0.0
    %289 = vmatprep.subr.mxu0 0.0
    %290 = vmatpush1.msra.mxu0 0.0
    %291 = vmatprep.subr.mxu0 0.0
    %292 = vmatpush1.msra.mxu0 0.0
    %293 = vmatprep.subr.mxu0 0.0
    %294 = vmatpush1.msra.mxu0 0.0
    %295 = vmatprep.subr.mxu0 0.0
    %296 = vmatpush1.msra.mxu0 0.0
    %297 = vmatprep.subr.mxu0 0.0
    %298 = vmatpush1.msra.mxu0 0.0
    %299 = vmatprep.subr.mxu0 0.0
    %300 = vmatpush1.msra.mxu0 0.0
    %301 = vmatprep.subr.mxu0 0.0
    %302 = vmatpush1.msra.mxu0 0.0
    %303 = vmatprep.subr.mxu0 0.0
    %304 = vmatpush1.msra.mxu0 0.0
    %305 = vmatprep.subr.mxu0 0.0
    %306 = vmatpush1.msra.mxu0 0.0
    %307 = vmatprep.subr.mxu0 0.0
    %308 = vmatpush1.msra.mxu0 0.0
    %309 = vmatprep.subr.mxu0 0.0
    %310 = vmatpush1.msra.mxu0 0.0
    %311 = vmatprep.subr.mxu0 0.0
    %312 = vmatpush1.msra.mxu0 0.0
    %313 = vmatprep.subr.mxu0 0.0
    %314 = vmatpush1.msra.mxu0 0.0
    %315 = vmatprep.subr.mxu0 0.0
    %316 = vmatpush1.msra.mxu0 0.0
    %317 = vmatprep.subr.mxu0 0.0
    %318 = vmatpush1.msra.mxu0 0.0
    %319 = vmatprep.subr.mxu0 0.0
    %320 = vmatpush1.msra.mxu0 0.0
    %321 = vmatprep.subr.mxu0 0.0
    %322 = vmatpush1.msra.mxu0 0.0
    %323 = vmatprep.subr.mxu0 0.0
    %324 = vmatpush1.msra.mxu0 0.0
    %325 = vmatprep.mubr.f32.mxu0 0.0
    %326 = vmatmul.mubr.f32.gmra.mrb[0].mxu0 %v259
    %v327 = vpop.f32.mrb[0].mxu0
    %v328 = vadd.f32 %v255, %v327
    %v329 = vpop.f32.mrb[0].mxu0
    %330 = vdwg.mxu0
    %v331 = vtanh.pop %v328
    %v332 = vld [vmem:[%s7] sm:$0x1]
    %v334 = vlaneseq
    %v335 = vshrl.u32 %v334, 7
    %v336 = vsub.s32 0, %v335
    %v337 = vrot.slane %v332, %v336
    %v339 = vmul.f32 %v331, %v337
    %v340 = vsel %vm257, %v339, 0.0
    %341 = vadd.xlane.f32.xlu0 %v340
    %v342 = vpop.xlane.xlu0 %341
    %s343 = sld [smem:[#allocation2]]
    %v344 = vstv %s343
    %v345 = vadd.f32 %v342, %v344
    %vm346 = vcmask 7168
    %347 = vst.msk [vmem:[%s9] sm:$0xff] %vm346, %v345
    // Predicated region
    $region54: #{tpu_custom_call.1} parent=1 // pred_check
      _
    $region55: #{tpu_custom_call.1} parent=1 // pred_check_branch
      %349 = sbr.rel (0) target = $region57
    $region56: #{tpu_custom_call.1} parent=1 // pred_region
      _
    $region57: #{tpu_custom_call.1} parent=1 // pred_fallthru
      _
    // Predicated region
    $region58: #{tpu_custom_call.1} parent=1 // pred_check
      _
    $region59: #{tpu_custom_call.1} parent=1 // pred_check_branch
      %351 = sbr.rel (0) target = $region61
    $region60: #{tpu_custom_call.1} parent=1 // pred_region
      _
    $region61: #{tpu_custom_call.1} parent=1 // pred_fallthru
      _
    %352 = vsyncpa [#allocation4], 1
    %353 = vsyncpa [#allocation6], 1
    %354 = vsyncpa [#allocation9], 1

</llo_original>
